<compile_context>
chip_gen: v6e
topology: v6e:2x2x1
jax: 0.10.0
libtpu: 0.0.40
codegen_flags: <defaults>
</compile_context>

<pallas_src>
import jax
import jax.numpy as jnp
from jax import lax
from jax.experimental import pallas as pl
from jax.experimental.pallas import tpu as pltpu


def rnn_tagger_kernel(embeds_ref, w_ih_ref, w_hh_ref, b_ref,
                      w_out_ref, b_out_ref, out_ref, gx_sc, hall_sc):
    """LSTM recurrence + deferred tag projection + softmax.

    embeds_ref : (T, E)    f32   embedded sentence
    w_ih_ref   : (E, 4H)   f32   input->gates weights (pre-transposed)
    w_hh_ref   : (H, 4H)   f32   hidden->gates weights (pre-transposed)
    b_ref      : (1, 4H)   f32   combined bias (b_ih + b_hh)
    w_out_ref  : (H, K)    f32   hidden2tag weight (pre-transposed)
    b_out_ref  : (1, K)    f32   hidden2tag bias
    out_ref    : (T, K)    f32   softmax(tag_space)
    gx_sc      : (T, 4H)   f32   VMEM scratch: precomputed input->gates
    hall_sc    : (T, H)    f32   VMEM scratch: all hidden states
    """
    T = embeds_ref.shape[0]
    H = hall_sc.shape[1]

    # --- Hoisted batched input-to-gates matmul (off the serial path). ------
    gx_sc[...] = (jnp.dot(embeds_ref[...], w_ih_ref[...],
                          preferred_element_type=jnp.float32)
                  + b_ref[...])                                    # (T, 4H)

    w_hh = w_hh_ref[...]                                           # (H, 4H)

    # --- Serial recurrence: only the h-dependent matmul + gate math. -------
    def step(t, carry):
        h, c = carry                                               # (1, H) vregs
        gates = (gx_sc[pl.ds(t, 1), :]
                 + jnp.dot(h, w_hh, preferred_element_type=jnp.float32))  # (1, 4H)

        # One full-row sigmoid (single EUP pass), slice i/f/o from the result;
        # tanh only on the raw g slice.
        sig = jax.nn.sigmoid(gates)
        i_g = sig[:, 0 * H:1 * H]
        f_g = sig[:, 1 * H:2 * H]
        o_g = sig[:, 3 * H:4 * H]
        g_g = jnp.tanh(gates[:, 2 * H:3 * H])

        c_new = f_g * c + i_g * g_g
        h_new = o_g * jnp.tanh(c_new)

        # Store for the deferred projection; not on the h->h critical path.
        hall_sc[pl.ds(t, 1), :] = h_new
        return (h_new, c_new)

    h0 = jnp.zeros((1, H), jnp.float32)
    c0 = jnp.zeros((1, H), jnp.float32)
    lax.fori_loop(0, T, step, (h0, c0), unroll=True)

    # --- Deferred projection + batched softmax, single output store. -------
    logits = (jnp.dot(hall_sc[...], w_out_ref[...],
                      preferred_element_type=jnp.float32)
              + b_out_ref[...])                                    # (T, K)
    m = jnp.max(logits, axis=-1, keepdims=True)
    e = jnp.exp(logits - m)
    out_ref[...] = e / jnp.sum(e, axis=-1, keepdims=True)


def prepare_params(params):
    """One-time weight prep (transposes / casts) kept off the inference path."""
    H = params["w_hh"].shape[1]
    K = params["w_tag"].shape[0]
    return {
        "embedding": params["embedding"].astype(jnp.float32),            # (V, E)
        "w_ih_t": jnp.transpose(params["w_ih"]).astype(jnp.float32),     # (E, 4H)
        "w_hh_t": jnp.transpose(params["w_hh"]).astype(jnp.float32),     # (H, 4H)
        "b_comb": (params["b_ih"] + params["b_hh"]
                   ).reshape(1, 4 * H).astype(jnp.float32),              # (1, 4H)
        "w_tag_t": jnp.transpose(params["w_tag"]).astype(jnp.float32),   # (H, K)
        "b_tag_2d": params["b_tag"].reshape(1, K).astype(jnp.float32),   # (1, K)
    }


def rnn_tagger_forward(sentence, prepped):
    """JAX wrapper matching RNNTagger.forward(sentence) with batch=1."""
    embeds = jnp.take(prepped["embedding"], sentence, axis=0)      # (T, E)
    T = embeds.shape[0]
    H = prepped["w_hh_t"].shape[0]
    K = prepped["w_tag_t"].shape[1]

    vmem = pl.BlockSpec(memory_space=pltpu.MemorySpace.VMEM)
    return pl.pallas_call(
        rnn_tagger_kernel,
        out_shape=jax.ShapeDtypeStruct((T, K), jnp.float32),
        in_specs=[vmem] * 6,
        out_specs=vmem,
        scratch_shapes=[pltpu.VMEM((T, 4 * H), jnp.float32),   # gates_x
                        pltpu.VMEM((T, H), jnp.float32)],      # all hidden states
    )(embeds, prepped["w_ih_t"], prepped["w_hh_t"], prepped["b_comb"],
      prepped["w_tag_t"], prepped["b_tag_2d"])


def rnn_tagger_reference(sentence, prepped):
    """Pure-JAX reference for correctness checking."""
    embeds = jnp.take(prepped["embedding"], sentence, axis=0)      # (T, E)
    H = prepped["w_hh_t"].shape[0]
    gx = embeds @ prepped["w_ih_t"] + prepped["b_comb"]            # (T, 4H)

    def step(carry, g_x):
        h, c = carry
        gates = g_x[None, :] + h @ prepped["w_hh_t"]
        i_g = jax.nn.sigmoid(gates[:, 0 * H:1 * H])
        f_g = jax.nn.sigmoid(gates[:, 1 * H:2 * H])
        g_g = jnp.tanh(gates[:, 2 * H:3 * H])
        o_g = jax.nn.sigmoid(gates[:, 3 * H:4 * H])
        c_new = f_g * c + i_g * g_g
        h_new = o_g * jnp.tanh(c_new)
        return (h_new, c_new), h_new[0]

    h0 = jnp.zeros((1, H), jnp.float32)
    c0 = jnp.zeros((1, H), jnp.float32)
    _, hs = lax.scan(step, (h0, c0), gx)                           # (T, H)
    logits = hs @ prepped["w_tag_t"] + prepped["b_tag_2d"]
    return jax.nn.softmax(logits, axis=-1)


def init_params(key, embedding_dim, hidden_dim, vocab_size, tagset_size):
    ks = jax.random.split(key, 7)
    scale = 0.1
    return {
        "embedding": scale * jax.random.normal(ks[0], (vocab_size, embedding_dim), jnp.float32),
        "w_ih": scale * jax.random.normal(ks[1], (4 * hidden_dim, embedding_dim), jnp.float32),
        "w_hh": scale * jax.random.normal(ks[2], (4 * hidden_dim, hidden_dim), jnp.float32),
        "b_ih": scale * jax.random.normal(ks[3], (4 * hidden_dim,), jnp.float32),
        "b_hh": scale * jax.random.normal(ks[4], (4 * hidden_dim,), jnp.float32),
        "w_tag": scale * jax.random.normal(ks[5], (tagset_size, hidden_dim), jnp.float32),
        "b_tag": scale * jax.random.normal(ks[6], (tagset_size,), jnp.float32),
    }


if __name__ == "__main__":
    EMBEDDING_DIM = 16
    HIDDEN_DIM = 32
    VOCAB_SIZE = 50
    TAGSET_SIZE = 8
    SEQ_LEN = 8

    key = jax.random.PRNGKey(0)
    k_params, k_tokens = jax.random.split(key)
    params = init_params(k_params, EMBEDDING_DIM, HIDDEN_DIM, VOCAB_SIZE, TAGSET_SIZE)
    prepped = prepare_params(params)
    sentence = jax.random.randint(k_tokens, (SEQ_LEN,), 0, VOCAB_SIZE, dtype=jnp.int32)

    tag_scores = rnn_tagger_forward(sentence, prepped)
    jax.block_until_ready(tag_scores)

    assert tag_scores.shape == (SEQ_LEN, TAGSET_SIZE)
    # rows of a softmax must sum to 1
    assert jnp.allclose(jnp.sum(tag_scores, axis=-1), 1.0, atol=1e-5)

    # numerical parity with a pure-JAX reference of the same math
    ref = rnn_tagger_reference(sentence, prepped)
    assert jnp.allclose(tag_scores, ref, atol=1e-3, rtol=1e-3)

    print("KERNEL_OK")
</pallas_src>

<mosaic_0001>
module attributes {stable_mosaic.version = 11 : i64} {
  func.func @rnn_tagger_kernel(%arg0: memref<8x16xf32, #tpu.memory_space<vmem>>, %arg1: memref<16x128xf32, #tpu.memory_space<vmem>>, %arg2: memref<32x128xf32, #tpu.memory_space<vmem>>, %arg3: memref<1x128xf32, #tpu.memory_space<vmem>>, %arg4: memref<32x8xf32, #tpu.memory_space<vmem>>, %arg5: memref<1x8xf32, #tpu.memory_space<vmem>>, %arg6: memref<8x8xf32, #tpu.memory_space<vmem>>, %arg7: memref<8x128xf32, #tpu.memory_space<vmem>>, %arg8: memref<8x32xf32, #tpu.memory_space<vmem>>) attributes {dimension_semantics = [], scalar_prefetch = 0 : i64, scratch_operands = 2 : i64, tpu.core_type = #tpu.core_type<tc>} {
    %c0 = arith.constant 0 : index
    %c0_0 = arith.constant 0 : index
    %0 = vector.load %arg0[%c0, %c0_0] : memref<8x16xf32, #tpu.memory_space<vmem>>, vector<8x16xf32>
    %c0_1 = arith.constant 0 : index
    %c0_2 = arith.constant 0 : index
    %1 = vector.load %arg1[%c0_1, %c0_2] : memref<16x128xf32, #tpu.memory_space<vmem>>, vector<16x128xf32>
    %cst = arith.constant dense<0.000000e+00> : vector<8x128xf32>
    %2 = tpu.matmul %0, %1, %cst {dimension_numbers = #tpu.dot_dimension_numbers<[1], [0], [0], [1], [0, 0, 1, 1], [], []>} : vector<8x16xf32>, vector<16x128xf32>, vector<8x128xf32> -> vector<8x128xf32>
    %c0_3 = arith.constant 0 : index
    %c0_4 = arith.constant 0 : index
    %3 = vector.load %arg3[%c0_3, %c0_4] : memref<1x128xf32, #tpu.memory_space<vmem>>, vector<1x128xf32>
    %4 = vector.broadcast %3 : vector<1x128xf32> to vector<8x128xf32>
    %5 = arith.addf %2, %4 : vector<8x128xf32>
    %c0_5 = arith.constant 0 : index
    %c0_6 = arith.constant 0 : index
    %6 = vector.load %arg7[%c0_5, %c0_6] : memref<8x128xf32, #tpu.memory_space<vmem>>, vector<8x128xf32>
    tpu.vector_store %arg7[%c0_5, %c0_6], %5 {strides = array<i32>} : memref<8x128xf32, #tpu.memory_space<vmem>>, vector<8x128xf32>,
    %c0_7 = arith.constant 0 : index
    %c0_8 = arith.constant 0 : index
    %7 = vector.load %arg2[%c0_7, %c0_8] : memref<32x128xf32, #tpu.memory_space<vmem>>, vector<32x128xf32>
    %cst_9 = arith.constant 0.000000e+00 : f32
    %8 = vector.broadcast %cst_9 : f32 to vector<1x32xf32>
    %cst_10 = arith.constant 0.000000e+00 : f32
    %9 = vector.broadcast %cst_10 : f32 to vector<1x32xf32>
    %c0_i32 = arith.constant 0 : i32
    %10 = arith.index_cast %c0_i32 : i32 to index
    %c0_11 = arith.constant 0 : index
    %11 = vector.load %arg7[%10, %c0_11] : memref<8x128xf32, #tpu.memory_space<vmem>>, vector<1x128xf32>
    %cst_12 = arith.constant dense<0.000000e+00> : vector<1x128xf32>
    %12 = tpu.matmul %8, %7, %cst_12 {dimension_numbers = #tpu.dot_dimension_numbers<[1], [0], [0], [1], [0, 0, 1, 1], [], []>} : vector<1x32xf32>, vector<32x128xf32>, vector<1x128xf32> -> vector<1x128xf32>
    %13 = arith.addf %11, %12 : vector<1x128xf32>
    %14 = arith.negf %13 : vector<1x128xf32>
    %15 = math.exp %14 : vector<1x128xf32>
    %cst_13 = arith.constant 1.000000e+00 : f32
    %16 = vector.broadcast %cst_13 : f32 to vector<1x128xf32>
    %17 = arith.addf %16, %15 : vector<1x128xf32>
    %18 = arith.divf %16, %17 : vector<1x128xf32>
    %19 = vector.extract_strided_slice %18 {offsets = [0, 0], sizes = [1, 32], strides = [1, 1]} : vector<1x128xf32> to vector<1x32xf32>
    %20 = vector.extract_strided_slice %18 {offsets = [0, 32], sizes = [1, 32], strides = [1, 1]} : vector<1x128xf32> to vector<1x32xf32>
    %21 = vector.extract_strided_slice %18 {offsets = [0, 96], sizes = [1, 32], strides = [1, 1]} : vector<1x128xf32> to vector<1x32xf32>
    %22 = vector.extract_strided_slice %13 {offsets = [0, 64], sizes = [1, 32], strides = [1, 1]} : vector<1x128xf32> to vector<1x32xf32>
    %23 = math.tanh %22 : vector<1x32xf32>
    %24 = arith.mulf %20, %9 : vector<1x32xf32>
    %25 = arith.mulf %19, %23 : vector<1x32xf32>
    %26 = arith.addf %24, %25 : vector<1x32xf32>
    %27 = math.tanh %26 : vector<1x32xf32>
    %28 = arith.mulf %21, %27 : vector<1x32xf32>
    %29 = arith.index_cast %c0_i32 : i32 to index
    %c0_14 = arith.constant 0 : index
    %30 = vector.load %arg8[%29, %c0_14] : memref<8x32xf32, #tpu.memory_space<vmem>>, vector<1x32xf32>
    tpu.vector_store %arg8[%29, %c0_14], %28 {strides = array<i32>} : memref<8x32xf32, #tpu.memory_space<vmem>>, vector<1x32xf32>,
    %c1_i32 = arith.constant 1 : i32
    %31 = arith.index_cast %c1_i32 : i32 to index
    %c0_15 = arith.constant 0 : index
    %32 = vector.load %arg7[%31, %c0_15] : memref<8x128xf32, #tpu.memory_space<vmem>>, vector<1x128xf32>
    %cst_16 = arith.constant dense<0.000000e+00> : vector<1x128xf32>
    %33 = tpu.matmul %28, %7, %cst_16 {dimension_numbers = #tpu.dot_dimension_numbers<[1], [0], [0], [1], [0, 0, 1, 1], [], []>} : vector<1x32xf32>, vector<32x128xf32>, vector<1x128xf32> -> vector<1x128xf32>
    %34 = arith.addf %32, %33 : vector<1x128xf32>
    %35 = arith.negf %34 : vector<1x128xf32>
    %36 = math.exp %35 : vector<1x128xf32>
    %cst_17 = arith.constant 1.000000e+00 : f32
    %37 = vector.broadcast %cst_17 : f32 to vector<1x128xf32>
    %38 = arith.addf %37, %36 : vector<1x128xf32>
    %39 = arith.divf %37, %38 : vector<1x128xf32>
    %40 = vector.extract_strided_slice %39 {offsets = [0, 0], sizes = [1, 32], strides = [1, 1]} : vector<1x128xf32> to vector<1x32xf32>
    %41 = vector.extract_strided_slice %39 {offsets = [0, 32], sizes = [1, 32], strides = [1, 1]} : vector<1x128xf32> to vector<1x32xf32>
    %42 = vector.extract_strided_slice %39 {offsets = [0, 96], sizes = [1, 32], strides = [1, 1]} : vector<1x128xf32> to vector<1x32xf32>
    %43 = vector.extract_strided_slice %34 {offsets = [0, 64], sizes = [1, 32], strides = [1, 1]} : vector<1x128xf32> to vector<1x32xf32>
    %44 = math.tanh %43 : vector<1x32xf32>
    %45 = arith.mulf %41, %26 : vector<1x32xf32>
    %46 = arith.mulf %40, %44 : vector<1x32xf32>
    %47 = arith.addf %45, %46 : vector<1x32xf32>
    %48 = math.tanh %47 : vector<1x32xf32>
    %49 = arith.mulf %42, %48 : vector<1x32xf32>
    %50 = arith.index_cast %c1_i32 : i32 to index
    %c0_18 = arith.constant 0 : index
    %51 = vector.load %arg8[%50, %c0_18] : memref<8x32xf32, #tpu.memory_space<vmem>>, vector<1x32xf32>
    tpu.vector_store %arg8[%50, %c0_18], %49 {strides = array<i32>} : memref<8x32xf32, #tpu.memory_space<vmem>>, vector<1x32xf32>,
    %c2_i32 = arith.constant 2 : i32
    %52 = arith.index_cast %c2_i32 : i32 to index
    %c0_19 = arith.constant 0 : index
    %53 = vector.load %arg7[%52, %c0_19] : memref<8x128xf32, #tpu.memory_space<vmem>>, vector<1x128xf32>
    %cst_20 = arith.constant dense<0.000000e+00> : vector<1x128xf32>
    %54 = tpu.matmul %49, %7, %cst_20 {dimension_numbers = #tpu.dot_dimension_numbers<[1], [0], [0], [1], [0, 0, 1, 1], [], []>} : vector<1x32xf32>, vector<32x128xf32>, vector<1x128xf32> -> vector<1x128xf32>
    %55 = arith.addf %53, %54 : vector<1x128xf32>
    %56 = arith.negf %55 : vector<1x128xf32>
    %57 = math.exp %56 : vector<1x128xf32>
    %cst_21 = arith.constant 1.000000e+00 : f32
    %58 = vector.broadcast %cst_21 : f32 to vector<1x128xf32>
    %59 = arith.addf %58, %57 : vector<1x128xf32>
    %60 = arith.divf %58, %59 : vector<1x128xf32>
    %61 = vector.extract_strided_slice %60 {offsets = [0, 0], sizes = [1, 32], strides = [1, 1]} : vector<1x128xf32> to vector<1x32xf32>
    %62 = vector.extract_strided_slice %60 {offsets = [0, 32], sizes = [1, 32], strides = [1, 1]} : vector<1x128xf32> to vector<1x32xf32>
    %63 = vector.extract_strided_slice %60 {offsets = [0, 96], sizes = [1, 32], strides = [1, 1]} : vector<1x128xf32> to vector<1x32xf32>
    %64 = vector.extract_strided_slice %55 {offsets = [0, 64], sizes = [1, 32], strides = [1, 1]} : vector<1x128xf32> to vector<1x32xf32>
    %65 = math.tanh %64 : vector<1x32xf32>
    %66 = arith.mulf %62, %47 : vector<1x32xf32>
    %67 = arith.mulf %61, %65 : vector<1x32xf32>
    %68 = arith.addf %66, %67 : vector<1x32xf32>
    %69 = math.tanh %68 : vector<1x32xf32>
    %70 = arith.mulf %63, %69 : vector<1x32xf32>
    %71 = arith.index_cast %c2_i32 : i32 to index
    %c0_22 = arith.constant 0 : index
    %72 = vector.load %arg8[%71, %c0_22] : memref<8x32xf32, #tpu.memory_space<vmem>>, vector<1x32xf32>
    tpu.vector_store %arg8[%71, %c0_22], %70 {strides = array<i32>} : memref<8x32xf32, #tpu.memory_space<vmem>>, vector<1x32xf32>,
    %c3_i32 = arith.constant 3 : i32
    %73 = arith.index_cast %c3_i32 : i32 to index
    %c0_23 = arith.constant 0 : index
    %74 = vector.load %arg7[%73, %c0_23] : memref<8x128xf32, #tpu.memory_space<vmem>>, vector<1x128xf32>
    %cst_24 = arith.constant dense<0.000000e+00> : vector<1x128xf32>
    %75 = tpu.matmul %70, %7, %cst_24 {dimension_numbers = #tpu.dot_dimension_numbers<[1], [0], [0], [1], [0, 0, 1, 1], [], []>} : vector<1x32xf32>, vector<32x128xf32>, vector<1x128xf32> -> vector<1x128xf32>
    %76 = arith.addf %74, %75 : vector<1x128xf32>
    %77 = arith.negf %76 : vector<1x128xf32>
    %78 = math.exp %77 : vector<1x128xf32>
    %cst_25 = arith.constant 1.000000e+00 : f32
    %79 = vector.broadcast %cst_25 : f32 to vector<1x128xf32>
    %80 = arith.addf %79, %78 : vector<1x128xf32>
    %81 = arith.divf %79, %80 : vector<1x128xf32>
    %82 = vector.extract_strided_slice %81 {offsets = [0, 0], sizes = [1, 32], strides = [1, 1]} : vector<1x128xf32> to vector<1x32xf32>
    %83 = vector.extract_strided_slice %81 {offsets = [0, 32], sizes = [1, 32], strides = [1, 1]} : vector<1x128xf32> to vector<1x32xf32>
    %84 = vector.extract_strided_slice %81 {offsets = [0, 96], sizes = [1, 32], strides = [1, 1]} : vector<1x128xf32> to vector<1x32xf32>
    %85 = vector.extract_strided_slice %76 {offsets = [0, 64], sizes = [1, 32], strides = [1, 1]} : vector<1x128xf32> to vector<1x32xf32>
    %86 = math.tanh %85 : vector<1x32xf32>
    %87 = arith.mulf %83, %68 : vector<1x32xf32>
    %88 = arith.mulf %82, %86 : vector<1x32xf32>
    %89 = arith.addf %87, %88 : vector<1x32xf32>
    %90 = math.tanh %89 : vector<1x32xf32>
    %91 = arith.mulf %84, %90 : vector<1x32xf32>
    %92 = arith.index_cast %c3_i32 : i32 to index
    %c0_26 = arith.constant 0 : index
    %93 = vector.load %arg8[%92, %c0_26] : memref<8x32xf32, #tpu.memory_space<vmem>>, vector<1x32xf32>
    tpu.vector_store %arg8[%92, %c0_26], %91 {strides = array<i32>} : memref<8x32xf32, #tpu.memory_space<vmem>>, vector<1x32xf32>,
    %c4_i32 = arith.constant 4 : i32
    %94 = arith.index_cast %c4_i32 : i32 to index
    %c0_27 = arith.constant 0 : index
    %95 = vector.load %arg7[%94, %c0_27] : memref<8x128xf32, #tpu.memory_space<vmem>>, vector<1x128xf32>
    %cst_28 = arith.constant dense<0.000000e+00> : vector<1x128xf32>
    %96 = tpu.matmul %91, %7, %cst_28 {dimension_numbers = #tpu.dot_dimension_numbers<[1], [0], [0], [1], [0, 0, 1, 1], [], []>} : vector<1x32xf32>, vector<32x128xf32>, vector<1x128xf32> -> vector<1x128xf32>
    %97 = arith.addf %95, %96 : vector<1x128xf32>
    %98 = arith.negf %97 : vector<1x128xf32>
    %99 = math.exp %98 : vector<1x128xf32>
    %cst_29 = arith.constant 1.000000e+00 : f32
    %100 = vector.broadcast %cst_29 : f32 to vector<1x128xf32>
    %101 = arith.addf %100, %99 : vector<1x128xf32>
    %102 = arith.divf %100, %101 : vector<1x128xf32>
    %103 = vector.extract_strided_slice %102 {offsets = [0, 0], sizes = [1, 32], strides = [1, 1]} : vector<1x128xf32> to vector<1x32xf32>
    %104 = vector.extract_strided_slice %102 {offsets = [0, 32], sizes = [1, 32], strides = [1, 1]} : vector<1x128xf32> to vector<1x32xf32>
    %105 = vector.extract_strided_slice %102 {offsets = [0, 96], sizes = [1, 32], strides = [1, 1]} : vector<1x128xf32> to vector<1x32xf32>
    %106 = vector.extract_strided_slice %97 {offsets = [0, 64], sizes = [1, 32], strides = [1, 1]} : vector<1x128xf32> to vector<1x32xf32>
    %107 = math.tanh %106 : vector<1x32xf32>
    %108 = arith.mulf %104, %89 : vector<1x32xf32>
    %109 = arith.mulf %103, %107 : vector<1x32xf32>
    %110 = arith.addf %108, %109 : vector<1x32xf32>
    %111 = math.tanh %110 : vector<1x32xf32>
    %112 = arith.mulf %105, %111 : vector<1x32xf32>
    %113 = arith.index_cast %c4_i32 : i32 to index
    %c0_30 = arith.constant 0 : index
    %114 = vector.load %arg8[%113, %c0_30] : memref<8x32xf32, #tpu.memory_space<vmem>>, vector<1x32xf32>
    tpu.vector_store %arg8[%113, %c0_30], %112 {strides = array<i32>} : memref<8x32xf32, #tpu.memory_space<vmem>>, vector<1x32xf32>,
    %c5_i32 = arith.constant 5 : i32
    %115 = arith.index_cast %c5_i32 : i32 to index
    %c0_31 = arith.constant 0 : index
    %116 = vector.load %arg7[%115, %c0_31] : memref<8x128xf32, #tpu.memory_space<vmem>>, vector<1x128xf32>
    %cst_32 = arith.constant dense<0.000000e+00> : vector<1x128xf32>
    %117 = tpu.matmul %112, %7, %cst_32 {dimension_numbers = #tpu.dot_dimension_numbers<[1], [0], [0], [1], [0, 0, 1, 1], [], []>} : vector<1x32xf32>, vector<32x128xf32>, vector<1x128xf32> -> vector<1x128xf32>
    %118 = arith.addf %116, %117 : vector<1x128xf32>
    %119 = arith.negf %118 : vector<1x128xf32>
    %120 = math.exp %119 : vector<1x128xf32>
    %cst_33 = arith.constant 1.000000e+00 : f32
    %121 = vector.broadcast %cst_33 : f32 to vector<1x128xf32>
    %122 = arith.addf %121, %120 : vector<1x128xf32>
    %123 = arith.divf %121, %122 : vector<1x128xf32>
    %124 = vector.extract_strided_slice %123 {offsets = [0, 0], sizes = [1, 32], strides = [1, 1]} : vector<1x128xf32> to vector<1x32xf32>
    %125 = vector.extract_strided_slice %123 {offsets = [0, 32], sizes = [1, 32], strides = [1, 1]} : vector<1x128xf32> to vector<1x32xf32>
    %126 = vector.extract_strided_slice %123 {offsets = [0, 96], sizes = [1, 32], strides = [1, 1]} : vector<1x128xf32> to vector<1x32xf32>
    %127 = vector.extract_strided_slice %118 {offsets = [0, 64], sizes = [1, 32], strides = [1, 1]} : vector<1x128xf32> to vector<1x32xf32>
    %128 = math.tanh %127 : vector<1x32xf32>
    %129 = arith.mulf %125, %110 : vector<1x32xf32>
    %130 = arith.mulf %124, %128 : vector<1x32xf32>
    %131 = arith.addf %129, %130 : vector<1x32xf32>
    %132 = math.tanh %131 : vector<1x32xf32>
    %133 = arith.mulf %126, %132 : vector<1x32xf32>
    %134 = arith.index_cast %c5_i32 : i32 to index
    %c0_34 = arith.constant 0 : index
    %135 = vector.load %arg8[%134, %c0_34] : memref<8x32xf32, #tpu.memory_space<vmem>>, vector<1x32xf32>
    tpu.vector_store %arg8[%134, %c0_34], %133 {strides = array<i32>} : memref<8x32xf32, #tpu.memory_space<vmem>>, vector<1x32xf32>,
    %c6_i32 = arith.constant 6 : i32
    %136 = arith.index_cast %c6_i32 : i32 to index
    %c0_35 = arith.constant 0 : index
    %137 = vector.load %arg7[%136, %c0_35] : memref<8x128xf32, #tpu.memory_space<vmem>>, vector<1x128xf32>
    %cst_36 = arith.constant dense<0.000000e+00> : vector<1x128xf32>
    %138 = tpu.matmul %133, %7, %cst_36 {dimension_numbers = #tpu.dot_dimension_numbers<[1], [0], [0], [1], [0, 0, 1, 1], [], []>} : vector<1x32xf32>, vector<32x128xf32>, vector<1x128xf32> -> vector<1x128xf32>
    %139 = arith.addf %137, %138 : vector<1x128xf32>
    %140 = arith.negf %139 : vector<1x128xf32>
    %141 = math.exp %140 : vector<1x128xf32>
    %cst_37 = arith.constant 1.000000e+00 : f32
    %142 = vector.broadcast %cst_37 : f32 to vector<1x128xf32>
    %143 = arith.addf %142, %141 : vector<1x128xf32>
    %144 = arith.divf %142, %143 : vector<1x128xf32>
    %145 = vector.extract_strided_slice %144 {offsets = [0, 0], sizes = [1, 32], strides = [1, 1]} : vector<1x128xf32> to vector<1x32xf32>
    %146 = vector.extract_strided_slice %144 {offsets = [0, 32], sizes = [1, 32], strides = [1, 1]} : vector<1x128xf32> to vector<1x32xf32>
    %147 = vector.extract_strided_slice %144 {offsets = [0, 96], sizes = [1, 32], strides = [1, 1]} : vector<1x128xf32> to vector<1x32xf32>
    %148 = vector.extract_strided_slice %139 {offsets = [0, 64], sizes = [1, 32], strides = [1, 1]} : vector<1x128xf32> to vector<1x32xf32>
    %149 = math.tanh %148 : vector<1x32xf32>
    %150 = arith.mulf %146, %131 : vector<1x32xf32>
    %151 = arith.mulf %145, %149 : vector<1x32xf32>
    %152 = arith.addf %150, %151 : vector<1x32xf32>
    %153 = math.tanh %152 : vector<1x32xf32>
    %154 = arith.mulf %147, %153 : vector<1x32xf32>
    %155 = arith.index_cast %c6_i32 : i32 to index
    %c0_38 = arith.constant 0 : index
    %156 = vector.load %arg8[%155, %c0_38] : memref<8x32xf32, #tpu.memory_space<vmem>>, vector<1x32xf32>
    tpu.vector_store %arg8[%155, %c0_38], %154 {strides = array<i32>} : memref<8x32xf32, #tpu.memory_space<vmem>>, vector<1x32xf32>,
    %c7_i32 = arith.constant 7 : i32
    %157 = arith.index_cast %c7_i32 : i32 to index
    %c0_39 = arith.constant 0 : index
    %158 = vector.load %arg7[%157, %c0_39] : memref<8x128xf32, #tpu.memory_space<vmem>>, vector<1x128xf32>
    %cst_40 = arith.constant dense<0.000000e+00> : vector<1x128xf32>
    %159 = tpu.matmul %154, %7, %cst_40 {dimension_numbers = #tpu.dot_dimension_numbers<[1], [0], [0], [1], [0, 0, 1, 1], [], []>} : vector<1x32xf32>, vector<32x128xf32>, vector<1x128xf32> -> vector<1x128xf32>
    %160 = arith.addf %158, %159 : vector<1x128xf32>
    %161 = arith.negf %160 : vector<1x128xf32>
    %162 = math.exp %161 : vector<1x128xf32>
    %cst_41 = arith.constant 1.000000e+00 : f32
    %163 = vector.broadcast %cst_41 : f32 to vector<1x128xf32>
    %164 = arith.addf %163, %162 : vector<1x128xf32>
    %165 = arith.divf %163, %164 : vector<1x128xf32>
    %166 = vector.extract_strided_slice %165 {offsets = [0, 0], sizes = [1, 32], strides = [1, 1]} : vector<1x128xf32> to vector<1x32xf32>
    %167 = vector.extract_strided_slice %165 {offsets = [0, 32], sizes = [1, 32], strides = [1, 1]} : vector<1x128xf32> to vector<1x32xf32>
    %168 = vector.extract_strided_slice %165 {offsets = [0, 96], sizes = [1, 32], strides = [1, 1]} : vector<1x128xf32> to vector<1x32xf32>
    %169 = vector.extract_strided_slice %160 {offsets = [0, 64], sizes = [1, 32], strides = [1, 1]} : vector<1x128xf32> to vector<1x32xf32>
    %170 = math.tanh %169 : vector<1x32xf32>
    %171 = arith.mulf %167, %152 : vector<1x32xf32>
    %172 = arith.mulf %166, %170 : vector<1x32xf32>
    %173 = arith.addf %171, %172 : vector<1x32xf32>
    %174 = math.tanh %173 : vector<1x32xf32>
    %175 = arith.mulf %168, %174 : vector<1x32xf32>
    %176 = arith.index_cast %c7_i32 : i32 to index
    %c0_42 = arith.constant 0 : index
    %177 = vector.load %arg8[%176, %c0_42] : memref<8x32xf32, #tpu.memory_space<vmem>>, vector<1x32xf32>
    tpu.vector_store %arg8[%176, %c0_42], %175 {strides = array<i32>} : memref<8x32xf32, #tpu.memory_space<vmem>>, vector<1x32xf32>,
    %c8_i32 = arith.constant 8 : i32
    %c0_43 = arith.constant 0 : index
    %c0_44 = arith.constant 0 : index
    %178 = vector.load %arg8[%c0_43, %c0_44] : memref<8x32xf32, #tpu.memory_space<vmem>>, vector<8x32xf32>
    %c0_45 = arith.constant 0 : index
    %c0_46 = arith.constant 0 : index
    %179 = vector.load %arg4[%c0_45, %c0_46] : memref<32x8xf32, #tpu.memory_space<vmem>>, vector<32x8xf32>
    %cst_47 = arith.constant dense<0.000000e+00> : vector<8x8xf32>
    %180 = tpu.matmul %178, %179, %cst_47 {dimension_numbers = #tpu.dot_dimension_numbers<[1], [0], [0], [1], [0, 0, 1, 1], [], []>} : vector<8x32xf32>, vector<32x8xf32>, vector<8x8xf32> -> vector<8x8xf32>
    %c0_48 = arith.constant 0 : index
    %c0_49 = arith.constant 0 : index
    %181 = vector.load %arg5[%c0_48, %c0_49] : memref<1x8xf32, #tpu.memory_space<vmem>>, vector<1x8xf32>
    %182 = vector.broadcast %181 : vector<1x8xf32> to vector<8x8xf32>
    %183 = arith.addf %180, %182 : vector<8x8xf32>
    %cst_50 = arith.constant dense<0xFF800000> : vector<8xf32>
    %184 = vector.multi_reduction <maximumf>, %183, %cst_50 [1] : vector<8x8xf32> to vector<8xf32>
    %185 = vector.shape_cast %184 : vector<8xf32> to vector<8x1xf32>
    %186 = vector.broadcast %185 : vector<8x1xf32> to vector<8x8xf32>
    %187 = arith.subf %183, %186 : vector<8x8xf32>
    %188 = math.exp %187 : vector<8x8xf32>
    %cst_51 = arith.constant dense<0.000000e+00> : vector<8xf32>
    %189 = vector.multi_reduction <add>, %188, %cst_51 [1] : vector<8x8xf32> to vector<8xf32>
    %190 = vector.shape_cast %189 : vector<8xf32> to vector<8x1xf32>
    %191 = vector.broadcast %190 : vector<8x1xf32> to vector<8x8xf32>
    %192 = arith.divf %188, %191 : vector<8x8xf32>
    %c0_52 = arith.constant 0 : index
    %c0_53 = arith.constant 0 : index
    %193 = vector.load %arg6[%c0_52, %c0_53] : memref<8x8xf32, #tpu.memory_space<vmem>>, vector<8x8xf32>
    tpu.vector_store %arg6[%c0_52, %c0_53], %192 {strides = array<i32>} : memref<8x8xf32, #tpu.memory_space<vmem>>, vector<8x8xf32>,
    return
  }
}

</mosaic_0001>

<llo_original>
// kernel: tpu_custom_call.1
$region0: #{tpu_custom_call.1}
  #allocation0 [shape = 'u32[]', space=smem, size = 0x4, offset = 0x4, fixed_abs, tag = 'smem constant byte address 0x4 - core index']
  #allocation1 [shape = 'u32[144,128]{1,0:T(1,128)}', space=vmem, size = 0x12000, scoped, tag = 'internal scratch']
  #allocation2 [shape = 'f32[8,128]{1,0:T(8,128)}', space=vmem, size = 0x1000, scoped, tag = 'scratch operand']
  #allocation3 [shape = 'f32[8,32]{1,0:T(8,128)}', space=vmem, size = 0x1000, scoped, tag = 'scratch operand']
  %s0 = inlined_call_operand.vmem [shape: f32[8,16], index: 0, kind: input, shape index: {}]
  %s1 = inlined_call_operand.hbm [shape: f32[16,128], index: 1, kind: input, shape index: {}]
  %s2 = inlined_call_operand.vmem [shape: f32[32,128], index: 2, kind: input, shape index: {}]
  %s3 = inlined_call_operand.vmem [shape: f32[1,128], index: 3, kind: input, shape index: {}]
  %s4 = inlined_call_operand.vmem [shape: f32[32,8], index: 4, kind: input, shape index: {}]
  %s5 = inlined_call_operand.vmem [shape: f32[1,8], index: 5, kind: input, shape index: {}]
  %s6 = inlined_call_operand.hbm [shape: f32[8,8], index: 6, kind: output, shape index: {}]
  %s7 = sld [smem:[#allocation0]]
  $region38: #{tpu_custom_call.1} parent=0
    _
  %s9 = ssub.s32 1, %s7
  %s10 = scalar_select 0, %s9, %s7
  $region1: #{tpu_custom_call.1} parent=0
    #allocation4 [shape = 'u8[8192]{0}', space=vmem, size = 0x2000, scoped, tag = 'input window, operand 1, single buffered']
    #allocation5 [shape = 's32[1]{0}', space=sflag, size = 0x4, scoped, tag = 'scoped memory for tpu_custom_call.1']
    #allocation6 [shape = 's32[1]{0}', space=sflag, size = 0x4, scoped, tag = 'scoped memory for tpu_custom_call.1']
    #allocation7 [shape = 'u8[4096]{0}', space=vmem, size = 0x1000, scoped, tag = 'output window, operand 0, single buffered']
    %11 = vsyncpa [#allocation5], 0
    %12 = vsyncpa [#allocation6], 0
    // Predicated region
    $region2: #{tpu_custom_call.1} parent=1 // pred_check
      _
    $region3: #{tpu_custom_call.1} parent=1 // pred_check_branch
      %14 = sbr.rel (0) target = $region5
    $region4: #{tpu_custom_call.1} parent=1 // pred_region
      _
    $region5: #{tpu_custom_call.1} parent=1 // pred_fallthru
      _
    // Predicated region
    $region6: #{tpu_custom_call.1} parent=1 // pred_check
      _
    $region7: #{tpu_custom_call.1} parent=1 // pred_check_branch
      %16 = sbr.rel (0) target = $region9
    $region8: #{tpu_custom_call.1} parent=1 // pred_region
      %s18 = ssub.s32 256, 256
      %19 = vsyncadd [#allocation5], %s18
      %s20 = sshll.u32 [#allocation4], 4
      %s21 = int_to_ptr.vmem [resolvable:$true] %s20
      %26 = dma.hbm_to_vmem [thread:$0]  %s1, 256, %s21, [#allocation5], 128, 128, 8
    $region9: #{tpu_custom_call.1} parent=1 // pred_fallthru
      _
    // Predicated region
    $region10: #{tpu_custom_call.1} parent=1 // pred_check
      _
    $region11: #{tpu_custom_call.1} parent=1 // pred_check_branch
      %28 = sbr.rel (0) target = $region13
    $region12: #{tpu_custom_call.1} parent=1 // pred_region
      _
    $region13: #{tpu_custom_call.1} parent=1 // pred_fallthru
      _
    // Predicated region
    $region14: #{tpu_custom_call.1} parent=1 // pred_check
      _
    $region15: #{tpu_custom_call.1} parent=1 // pred_check_branch
      %30 = sbr.rel (0) target = $region17
    $region16: #{tpu_custom_call.1} parent=1 // pred_region
      _
    $region17: #{tpu_custom_call.1} parent=1 // pred_fallthru
      _
    // Predicated region
    $region18: #{tpu_custom_call.1} parent=1 // pred_check
      _
    $region19: #{tpu_custom_call.1} parent=1 // pred_check_branch
      %32 = sbr.rel (0) target = $region21
    $region20: #{tpu_custom_call.1} parent=1 // pred_region
      _
    $region21: #{tpu_custom_call.1} parent=1 // pred_fallthru
      _
    // Predicated region
    $region22: #{tpu_custom_call.1} parent=1 // pred_check
      _
    $region23: #{tpu_custom_call.1} parent=1 // pred_check_branch
      %34 = sbr.rel (0) target = $region25
    $region24: #{tpu_custom_call.1} parent=1 // pred_region
      _
    $region25: #{tpu_custom_call.1} parent=1 // pred_fallthru
      _
    // Predicated region
    $region26: #{tpu_custom_call.1} parent=1 // pred_check
      _
    $region27: #{tpu_custom_call.1} parent=1 // pred_check_branch
      %36 = sbr.rel (0) target = $region29
    $region28: #{tpu_custom_call.1} parent=1 // pred_region
      %37 = dma.done [#allocation5], 256
    $region29: #{tpu_custom_call.1} parent=1 // pred_fallthru
      _
    %v38 = vld [vmem:[%s0] sm:$0xff]
    %v39 = vld [vmem:[#allocation4] sm:$0xff]
    %v40 = vld [vmem:[#allocation4 + $0x8] sm:$0xff]
    %v41 = vld [vmem:[%s3] sm:$0x1]
    %v43 = vlaneseq
    %v44 = vshrl.u32 %v43, 7
    %v45 = vsub.s32 0, %v44
    %v46 = vrot.slane %v41, %v45
    %vm48 = vcmask 130048
    %v50 = vsel %vm48, %v38, 0
    %52 = vmatprep.subr.mxu0 0.0
    %53 = vmatpush1.msra.mxu0 0.0
    %54 = vmatprep.subr.mxu0 0.0
    %55 = vmatpush1.msra.mxu0 0.0
    %56 = vmatprep.subr.mxu0 0.0
    %57 = vmatpush1.msra.mxu0 0.0
    %58 = vmatprep.subr.mxu0 0.0
    %59 = vmatpush1.msra.mxu0 0.0
    %60 = vmatprep.subr.mxu0 0.0
    %61 = vmatpush1.msra.mxu0 0.0
    %62 = vmatprep.subr.mxu0 0.0
    %63 = vmatpush1.msra.mxu0 0.0
    %64 = vmatprep.subr.mxu0 0.0
    %65 = vmatpush1.msra.mxu0 0.0
    %66 = vmatprep.subr.mxu0 0.0
    %67 = vmatpush1.msra.mxu0 0.0
    %68 = vmatprep.subr.mxu0 0.0
    %69 = vmatpush1.msra.mxu0 0.0
    %70 = vmatprep.subr.mxu0 0.0
    %71 = vmatpush1.msra.mxu0 0.0
    %72 = vmatprep.subr.mxu0 0.0
    %73 = vmatpush1.msra.mxu0 0.0
    %74 = vmatprep.subr.mxu0 0.0
    %75 = vmatpush1.msra.mxu0 0.0
    %76 = vmatprep.subr.mxu0 0.0
    %77 = vmatpush1.msra.mxu0 0.0
    %78 = vmatprep.subr.mxu0 0.0
    %79 = vmatpush1.msra.mxu0 0.0
    %80 = vmatprep.subr.mxu0 0.0
    %81 = vmatpush1.msra.mxu0 %v40
    %82 = vmatprep.subr.mxu0 0.0
    %83 = vmatpush1.msra.mxu0 %v39
    %84 = vmatprep.subr.mxu0 0.0
    %85 = vmatpush2.msra.mxu0 0.0
    %86 = vmatprep.subr.mxu0 0.0
    %87 = vmatpush2.msra.mxu0 0.0
    %88 = vmatprep.subr.mxu0 0.0
    %89 = vmatpush2.msra.mxu0 0.0
    %90 = vmatprep.subr.mxu0 0.0
    %91 = vmatpush2.msra.mxu0 0.0
    %92 = vmatprep.subr.mxu0 0.0
    %93 = vmatpush2.msra.mxu0 0.0
    %94 = vmatprep.subr.mxu0 0.0
    %95 = vmatpush2.msra.mxu0 0.0
    %96 = vmatprep.subr.mxu0 0.0
    %97 = vmatpush2.msra.mxu0 0.0
    %98 = vmatprep.subr.mxu0 0.0
    %99 = vmatpush2.msra.mxu0 0.0
    %100 = vmatprep.subr.mxu0 0.0
    %101 = vmatpush2.msra.mxu0 0.0
    %102 = vmatprep.subr.mxu0 0.0
    %103 = vmatpush2.msra.mxu0 0.0
    %104 = vmatprep.subr.mxu0 0.0
    %105 = vmatpush2.msra.mxu0 0.0
    %106 = vmatprep.subr.mxu0 0.0
    %107 = vmatpush2.msra.mxu0 0.0
    %108 = vmatprep.subr.mxu0 0.0
    %109 = vmatpush2.msra.mxu0 0.0
    %110 = vmatprep.subr.mxu0 0.0
    %111 = vmatpush2.msra.mxu0 0.0
    %112 = vmatprep.subr.mxu0 0.0
    %113 = vmatpush2.msra.mxu0 0.0
    %114 = vmatprep.subr.mxu0 0.0
    %115 = vmatpush2.msra.mxu0 0.0
    %116 = vmatprep.mubr.f32.mxu0 0.0
    %117 = vmatmul.mubr.f32.gmra.mxu0 %v50
    %v118 = vpop.f32.mrf.mxu0
    %v119 = vadd.f32 %v46, %v118
    %v120 = vpop.f32.mrf.mxu0
    %121 = vdwg.mxu0
    %122 = vst [vmem:[#allocation2] sm:$0xff] %v119
    %v123 = vld [vmem:[%s2] sm:$0xff]
    %v124 = vld [vmem:[%s2 + $0x8] sm:$0xff]
    %v125 = vld [vmem:[%s2 + $0x10] sm:$0xff]
    %v126 = vld [vmem:[%s2 + $0x18] sm:$0xff]
    %v127 = vld [vmem:[#allocation2] sm:$0x1]
    %vm128 = vcmask 261120
    %v130 = vsel %vm128, 0.0, 0
    %132 = vmatprep.subr.mxu0 0.0
    %133 = vmatpush1.msra.mxu0 0.0
    %134 = vmatprep.subr.mxu0 0.0
    %135 = vmatpush1.msra.mxu0 0.0
    %136 = vmatprep.subr.mxu0 0.0
    %137 = vmatpush1.msra.mxu0 0.0
    %138 = vmatprep.subr.mxu0 0.0
    %139 = vmatpush1.msra.mxu0 0.0
    %140 = vmatprep.subr.mxu0 0.0
    %141 = vmatpush1.msra.mxu0 0.0
    %142 = vmatprep.subr.mxu0 0.0
    %143 = vmatpush1.msra.mxu0 0.0
    %144 = vmatprep.subr.mxu0 0.0
    %145 = vmatpush1.msra.mxu0 0.0
    %146 = vmatprep.subr.mxu0 0.0
    %147 = vmatpush1.msra.mxu0 0.0
    %148 = vmatprep.subr.mxu0 0.0
    %149 = vmatpush1.msra.mxu0 0.0
    %150 = vmatprep.subr.mxu0 0.0
    %151 = vmatpush1.msra.mxu0 0.0
    %152 = vmatprep.subr.mxu0 0.0
    %153 = vmatpush1.msra.mxu0 0.0
    %154 = vmatprep.subr.mxu0 0.0
    %155 = vmatpush1.msra.mxu0 0.0
    %156 = vmatprep.subr.mxu0 0.0
    %157 = vmatpush1.msra.mxu0 %v126
    %158 = vmatprep.subr.mxu0 0.0
    %159 = vmatpush1.msra.mxu0 %v125
    %160 = vmatprep.subr.mxu0 0.0
    %161 = vmatpush1.msra.mxu0 %v124
    %162 = vmatprep.subr.mxu0 0.0
    %163 = vmatpush1.msra.mxu0 %v123
    %164 = vmatprep.subr.mxu0 0.0
    %165 = vmatpush2.msra.mxu0 0.0
    %166 = vmatprep.subr.mxu0 0.0
    %167 = vmatpush2.msra.mxu0 0.0
    %168 = vmatprep.subr.mxu0 0.0
    %169 = vmatpush2.msra.mxu0 0.0
    %170 = vmatprep.subr.mxu0 0.0
    %171 = vmatpush2.msra.mxu0 0.0
    %172 = vmatprep.subr.mxu0 0.0
    %173 = vmatpush2.msra.mxu0 0.0
    %174 = vmatprep.subr.mxu0 0.0
    %175 = vmatpush2.msra.mxu0 0.0
    %176 = vmatprep.subr.mxu0 0.0
    %177 = vmatpush2.msra.mxu0 0.0
    %178 = vmatprep.subr.mxu0 0.0
    %179 = vmatpush2.msra.mxu0 0.0
    %180 = vmatprep.subr.mxu0 0.0
    %181 = vmatpush2.msra.mxu0 0.0
    %182 = vmatprep.subr.mxu0 0.0
    %183 = vmatpush2.msra.mxu0 0.0
    %184 = vmatprep.subr.mxu0 0.0
    %185 = vmatpush2.msra.mxu0 0.0
    %186 = vmatprep.subr.mxu0 0.0
    %187 = vmatpush2.msra.mxu0 0.0
    %188 = vmatprep.subr.mxu0 0.0
    %189 = vmatpush2.msra.mxu0 0.0
    %190 = vmatprep.subr.mxu0 0.0
    %191 = vmatpush2.msra.mxu0 0.0
    %192 = vmatprep.subr.mxu0 0.0
    %193 = vmatpush2.msra.mxu0 0.0
    %194 = vmatprep.subr.mxu0 0.0
    %195 = vmatpush2.msra.mxu0 0.0
    %196 = vmatprep.mubr.f32.mxu0 0.0
    %197 = vmatmul.mubr.f32.gmra.mxu0 %v130
    %v198 = vpop.f32.mrf.mxu0
    %v199 = vadd.f32 0.0, %v198
    %v200 = vpop.f32.mrf.mxu0
    %201 = vdwg.mxu0
    %v202 = vadd.f32 %v127, %v199
    %v203 = vxor.u32 %v202, 2147483648
    %v204 = vmul.f32 %v203, 1.442695
    %v205 = vpow.pop %v204
    %v206 = vadd.f32 %v205, 1.0
    %v207 = vrcp.pop %v206
    %v208 = vmul.f32 1.0, %v207
    %v209 = vtanh.pop %v202
    %v210 = vmul.f32 %v208, 0.0
    %212 = vrot.lane.b32.xlu0 %v209, 64
    %v213 = vpop.permute.xlu0 %212
    %v215 = vmul.f32 %v208, %v213
    %217 = vrot.lane.b32.xlu0 %v215, 32
    %v218 = vpop.permute.xlu0 %217
    %v220 = vadd.f32 %v210, %v218
    %v221 = vtanh.pop %v220
    %223 = vrot.lane.b32.xlu0 %v221, 64
    %v224 = vpop.permute.xlu0 %223
    %v226 = vmul.f32 %v208, %v224
    %228 = vrot.lane.b32.xlu0 %v226, 32
    %v229 = vpop.permute.xlu0 %228
    %vm231 = vcmask 253952
    %232 = vst.msk [vmem:[#allocation3] sm:$0x1] %vm231, %v229
    %v233 = vld [vmem:[#allocation2 + $0x1] sm:$0x1]
    %v234 = vsel %vm128, %v229, 0
    %236 = vmatprep.subr.mxu0 0.0
    %237 = vmatpush1.msra.mxu0 0.0
    %238 = vmatprep.subr.mxu0 0.0
    %239 = vmatpush1.msra.mxu0 0.0
    %240 = vmatprep.subr.mxu0 0.0
    %241 = vmatpush1.msra.mxu0 0.0
    %242 = vmatprep.subr.mxu0 0.0
    %243 = vmatpush1.msra.mxu0 0.0
    %244 = vmatprep.subr.mxu0 0.0
    %245 = vmatpush1.msra.mxu0 0.0
    %246 = vmatprep.subr.mxu0 0.0
    %247 = vmatpush1.msra.mxu0 0.0
    %248 = vmatprep.subr.mxu0 0.0
    %249 = vmatpush1.msra.mxu0 0.0
    %250 = vmatprep.subr.mxu0 0.0
    %251 = vmatpush1.msra.mxu0 0.0
    %252 = vmatprep.subr.mxu0 0.0
    %253 = vmatpush1.msra.mxu0 0.0
    %254 = vmatprep.subr.mxu0 0.0
    %255 = vmatpush1.msra.mxu0 0.0
    %256 = vmatprep.subr.mxu0 0.0
    %257 = vmatpush1.msra.mxu0 0.0
    %258 = vmatprep.subr.mxu0 0.0
    %259 = vmatpush1.msra.mxu0 0.0
    %260 = vmatprep.subr.mxu0 0.0
    %261 = vmatpush1.msra.mxu0 %v126
    %262 = vmatprep.subr.mxu0 0.0
    %263 = vmatpush1.msra.mxu0 %v125
    %264 = vmatprep.subr.mxu0 0.0
    %265 = vmatpush1.msra.mxu0 %v124
    %266 = vmatprep.subr.mxu0 0.0
    %267 = vmatpush1.msra.mxu0 %v123
    %268 = vmatprep.subr.mxu0 0.0
    %269 = vmatpush2.msra.mxu0 0.0
    %270 = vmatprep.subr.mxu0 0.0
    %271 = vmatpush2.msra.mxu0 0.0
    %272 = vmatprep.subr.mxu0 0.0
    %273 = vmatpush2.msra.mxu0 0.0
    %274 = vmatprep.subr.mxu0 0.0
    %275 = vmatpush2.msra.mxu0 0.0
    %276 = vmatprep.subr.mxu0 0.0
    %277 = vmatpush2.msra.mxu0 0.0
    %278 = vmatprep.subr.mxu0 0.0
    %279 = vmatpush2.msra.mxu0 0.0
    %280 = vmatprep.subr.mxu0 0.0
    %281 = vmatpush2.msra.mxu0 0.0
    %282 = vmatprep.subr.mxu0 0.0
    %283 = vmatpush2.msra.mxu0 0.0
    %284 = vmatprep.subr.mxu0 0.0
    %285 = vmatpush2.msra.mxu0 0.0
    %286 = vmatprep.subr.mxu0 0.0
    %287 = vmatpush2.msra.mxu0 0.0
    %288 = vmatprep.subr.mxu0 0.0
    %289 = vmatpush2.msra.mxu0 0.0
    %290 = vmatprep.subr.mxu0 0.0
    %291 = vmatpush2.msra.mxu0 0.0
    %292 = vmatprep.subr.mxu0 0.0
    %293 = vmatpush2.msra.mxu0 0.0
    %294 = vmatprep.subr.mxu0 0.0
    %295 = vmatpush2.msra.mxu0 0.0
    %296 = vmatprep.subr.mxu0 0.0
    %297 = vmatpush2.msra.mxu0 0.0
    %298 = vmatprep.subr.mxu0 0.0
    %299 = vmatpush2.msra.mxu0 0.0
    %300 = vmatprep.mubr.f32.mxu0 0.0
    %301 = vmatmul.mubr.f32.gmra.mxu0 %v234
    %v302 = vpop.f32.mrf.mxu0
    %v303 = vadd.f32 0.0, %v302
    %v304 = vpop.f32.mrf.mxu0
    %305 = vdwg.mxu0
    %v306 = vadd.f32 %v233, %v303
    %v307 = vxor.u32 %v306, 2147483648
    %v308 = vmul.f32 %v307, 1.442695
    %v309 = vpow.pop %v308
    %v310 = vadd.f32 %v309, 1.0
    %v311 = vrcp.pop %v310
    %v312 = vmul.f32 1.0, %v311
    %v313 = vtanh.pop %v306
    %v314 = vmul.f32 %v312, %v220
    %316 = vrot.lane.b32.xlu0 %v313, 64
    %v317 = vpop.permute.xlu0 %316
    %v319 = vmul.f32 %v312, %v317
    %321 = vrot.lane.b32.xlu0 %v319, 32
    %v322 = vpop.permute.xlu0 %321
    %v324 = vadd.f32 %v314, %v322
    %v325 = vtanh.pop %v324
    %327 = vrot.lane.b32.xlu0 %v325, 64
    %v328 = vpop.permute.xlu0 %327
    %v330 = vmul.f32 %v312, %v328
    %332 = vrot.lane.b32.xlu0 %v330, 32
    %v333 = vpop.permute.xlu0 %332
    %335 = vst.msk [vmem:[#allocation3 + $0x1] sm:$0x1] %vm231, %v333
    %v336 = vld [vmem:[#allocation2 + $0x2] sm:$0x1]
    %v337 = vsel %vm128, %v333, 0
    %339 = vmatprep.subr.mxu0 0.0
    %340 = vmatpush1.msra.mxu0 0.0
    %341 = vmatprep.subr.mxu0 0.0
    %342 = vmatpush1.msra.mxu0 0.0
    %343 = vmatprep.subr.mxu0 0.0
    %344 = vmatpush1.msra.mxu0 0.0
    %345 = vmatprep.subr.mxu0 0.0
    %346 = vmatpush1.msra.mxu0 0.0
    %347 = vmatprep.subr.mxu0 0.0
    %348 = vmatpush1.msra.mxu0 0.0
    %349 = vmatprep.subr.mxu0 0.0
    %350 = vmatpush1.msra.mxu0 0.0
    %351 = vmatprep.subr.mxu0 0.0
    %352 = vmatpush1.msra.mxu0 0.0
    %353 = vmatprep.subr.mxu0 0.0
    %354 = vmatpush1.msra.mxu0 0.0
    %355 = vmatprep.subr.mxu0 0.0
    %356 = vmatpush1.msra.mxu0 0.0
    %357 = vmatprep.subr.mxu0 0.0
    %358 = vmatpush1.msra.mxu0 0.0
    %359 = vmatprep.subr.mxu0 0.0
    %360 = vmatpush1.msra.mxu0 0.0
    %361 = vmatprep.subr.mxu0 0.0
    %362 = vmatpush1.msra.mxu0 0.0
    %363 = vmatprep.subr.mxu0 0.0
    %364 = vmatpush1.msra.mxu0 %v126
    %365 = vmatprep.subr.mxu0 0.0
    %366 = vmatpush1.msra.mxu0 %v125
    %367 = vmatprep.subr.mxu0 0.0
    %368 = vmatpush1.msra.mxu0 %v124
    %369 = vmatprep.subr.mxu0 0.0
    %370 = vmatpush1.msra.mxu0 %v123
    %371 = vmatprep.subr.mxu0 0.0
    %372 = vmatpush2.msra.mxu0 0.0
    %373 = vmatprep.subr.mxu0 0.0
    %374 = vmatpush2.msra.mxu0 0.0
    %375 = vmatprep.subr.mxu0 0.0
    %376 = vmatpush2.msra.mxu0 0.0
    %377 = vmatprep.subr.mxu0 0.0
    %378 = vmatpush2.msra.mxu0 0.0
    %379 = vmatprep.subr.mxu0 0.0
    %380 = vmatpush2.msra.mxu0 0.0
    %381 = vmatprep.subr.mxu0 0.0
    %382 = vmatpush2.msra.mxu0 0.0
    %383 = vmatprep.subr.mxu0 0.0
    %384 = vmatpush2.msra.mxu0 0.0
    %385 = vmatprep.subr.mxu0 0.0
    %386 = vmatpush2.msra.mxu0 0.0
    %387 = vmatprep.subr.mxu0 0.0
    %388 = vmatpush2.msra.mxu0 0.0
    %389 = vmatprep.subr.mxu0 0.0
    %390 = vmatpush2.msra.mxu0 0.0
    %391 = vmatprep.subr.mxu0 0.0
    %392 = vmatpush2.msra.mxu0 0.0
    %393 = vmatprep.subr.mxu0 0.0
    %394 = vmatpush2.msra.mxu0 0.0
    %395 = vmatprep.subr.mxu0 0.0
    %396 = vmatpush2.msra.mxu0 0.0
    %397 = vmatprep.subr.mxu0 0.0
    %398 = vmatpush2.msra.mxu0 0.0
    %399 = vmatprep.subr.mxu0 0.0
    %400 = vmatpush2.msra.mxu0 0.0
    %401 = vmatprep.subr.mxu0 0.0
    %402 = vmatpush2.msra.mxu0 0.0
    %403 = vmatprep.mubr.f32.mxu0 0.0
    %404 = vmatmul.mubr.f32.gmra.mxu0 %v337
    %v405 = vpop.f32.mrf.mxu0
    %v406 = vadd.f32 0.0, %v405
    %v407 = vpop.f32.mrf.mxu0
    %408 = vdwg.mxu0
    %v409 = vadd.f32 %v336, %v406
    %v410 = vxor.u32 %v409, 2147483648
    %v411 = vmul.f32 %v410, 1.442695
    %v412 = vpow.pop %v411
    %v413 = vadd.f32 %v412, 1.0
    %v414 = vrcp.pop %v413
    %v415 = vmul.f32 1.0, %v414
    %v416 = vtanh.pop %v409
    %v417 = vmul.f32 %v415, %v324
    %419 = vrot.lane.b32.xlu0 %v416, 64
    %v420 = vpop.permute.xlu0 %419
    %v422 = vmul.f32 %v415, %v420
    %424 = vrot.lane.b32.xlu0 %v422, 32
    %v425 = vpop.permute.xlu0 %424
    %v427 = vadd.f32 %v417, %v425
    %v428 = vtanh.pop %v427
    %430 = vrot.lane.b32.xlu0 %v428, 64
    %v431 = vpop.permute.xlu0 %430
    %v433 = vmul.f32 %v415, %v431
    %435 = vrot.lane.b32.xlu0 %v433, 32
    %v436 = vpop.permute.xlu0 %435
    %438 = vst.msk [vmem:[#allocation3 + $0x2] sm:$0x1] %vm231, %v436
    %v439 = vld [vmem:[#allocation2 + $0x3] sm:$0x1]
    %v440 = vsel %vm128, %v436, 0
    %442 = vmatprep.subr.mxu0 0.0
    %443 = vmatpush1.msra.mxu0 0.0
    %444 = vmatprep.subr.mxu0 0.0
    %445 = vmatpush1.msra.mxu0 0.0
    %446 = vmatprep.subr.mxu0 0.0
    %447 = vmatpush1.msra.mxu0 0.0
    %448 = vmatprep.subr.mxu0 0.0
    %449 = vmatpush1.msra.mxu0 0.0
    %450 = vmatprep.subr.mxu0 0.0
    %451 = vmatpush1.msra.mxu0 0.0
    %452 = vmatprep.subr.mxu0 0.0
    %453 = vmatpush1.msra.mxu0 0.0
    %454 = vmatprep.subr.mxu0 0.0
    %455 = vmatpush1.msra.mxu0 0.0
    %456 = vmatprep.subr.mxu0 0.0
    %457 = vmatpush1.msra.mxu0 0.0
    %458 = vmatprep.subr.mxu0 0.0
    %459 = vmatpush1.msra.mxu0 0.0
    %460 = vmatprep.subr.mxu0 0.0
    %461 = vmatpush1.msra.mxu0 0.0
    %462 = vmatprep.subr.mxu0 0.0
    %463 = vmatpush1.msra.mxu0 0.0
    %464 = vmatprep.subr.mxu0 0.0
    %465 = vmatpush1.msra.mxu0 0.0
    %466 = vmatprep.subr.mxu0 0.0
    %467 = vmatpush1.msra.mxu0 %v126
    %468 = vmatprep.subr.mxu0 0.0
    %469 = vmatpush1.msra.mxu0 %v125
    %470 = vmatprep.subr.mxu0 0.0
    %471 = vmatpush1.msra.mxu0 %v124
    %472 = vmatprep.subr.mxu0 0.0
    %473 = vmatpush1.msra.mxu0 %v123
    %474 = vmatprep.subr.mxu0 0.0
    %475 = vmatpush2.msra.mxu0 0.0
    %476 = vmatprep.subr.mxu0 0.0
    %477 = vmatpush2.msra.mxu0 0.0
    %478 = vmatprep.subr.mxu0 0.0
    %479 = vmatpush2.msra.mxu0 0.0
    %480 = vmatprep.subr.mxu0 0.0
    %481 = vmatpush2.msra.mxu0 0.0
    %482 = vmatprep.subr.mxu0 0.0
    %483 = vmatpush2.msra.mxu0 0.0
    %484 = vmatprep.subr.mxu0 0.0
    %485 = vmatpush2.msra.mxu0 0.0
    %486 = vmatprep.subr.mxu0 0.0
    %487 = vmatpush2.msra.mxu0 0.0
    %488 = vmatprep.subr.mxu0 0.0
    %489 = vmatpush2.msra.mxu0 0.0
    %490 = vmatprep.subr.mxu0 0.0
    %491 = vmatpush2.msra.mxu0 0.0
    %492 = vmatprep.subr.mxu0 0.0
    %493 = vmatpush2.msra.mxu0 0.0
    %494 = vmatprep.subr.mxu0 0.0
    %495 = vmatpush2.msra.mxu0 0.0
    %496 = vmatprep.subr.mxu0 0.0
    %497 = vmatpush2.msra.mxu0 0.0
    %498 = vmatprep.subr.mxu0 0.0
    %499 = vmatpush2.msra.mxu0 0.0
    %500 = vmatprep.subr.mxu0 0.0
    %501 = vmatpush2.msra.mxu0 0.0
    %502 = vmatprep.subr.mxu0 0.0
    %503 = vmatpush2.msra.mxu0 0.0
    %504 = vmatprep.subr.mxu0 0.0
    %505 = vmatpush2.msra.mxu0 0.0
    %506 = vmatprep.mubr.f32.mxu0 0.0
    %507 = vmatmul.mubr.f32.gmra.mxu0 %v440
    %v508 = vpop.f32.mrf.mxu0
    %v509 = vadd.f32 0.0, %v508
    %v510 = vpop.f32.mrf.mxu0
    %511 = vdwg.mxu0
    %v512 = vadd.f32 %v439, %v509
    %v513 = vxor.u32 %v512, 2147483648
    %v514 = vmul.f32 %v513, 1.442695
    %v515 = vpow.pop %v514
    %v516 = vadd.f32 %v515, 1.0
    %v517 = vrcp.pop %v516
    %v518 = vmul.f32 1.0, %v517
    %v519 = vtanh.pop %v512
    %v520 = vmul.f32 %v518, %v427
    %522 = vrot.lane.b32.xlu0 %v519, 64
    %v523 = vpop.permute.xlu0 %522
    %v525 = vmul.f32 %v518, %v523
    %527 = vrot.lane.b32.xlu0 %v525, 32
    %v528 = vpop.permute.xlu0 %527
    %v530 = vadd.f32 %v520, %v528
    %v531 = vtanh.pop %v530
    %533 = vrot.lane.b32.xlu0 %v531, 64
    %v534 = vpop.permute.xlu0 %533
    %v536 = vmul.f32 %v518, %v534
    %538 = vrot.lane.b32.xlu0 %v536, 32
    %v539 = vpop.permute.xlu0 %538
    %541 = vst.msk [vmem:[#allocation3 + $0x3] sm:$0x1] %vm231, %v539
    %v542 = vld [vmem:[#allocation2 + $0x4] sm:$0x1]
    %v543 = vsel %vm128, %v539, 0
    %545 = vmatprep.subr.mxu0 0.0
    %546 = vmatpush1.msra.mxu0 0.0
    %547 = vmatprep.subr.mxu0 0.0
    %548 = vmatpush1.msra.mxu0 0.0
    %549 = vmatprep.subr.mxu0 0.0
    %550 = vmatpush1.msra.mxu0 0.0
    %551 = vmatprep.subr.mxu0 0.0
    %552 = vmatpush1.msra.mxu0 0.0
    %553 = vmatprep.subr.mxu0 0.0
    %554 = vmatpush1.msra.mxu0 0.0
    %555 = vmatprep.subr.mxu0 0.0
    %556 = vmatpush1.msra.mxu0 0.0
    %557 = vmatprep.subr.mxu0 0.0
    %558 = vmatpush1.msra.mxu0 0.0
    %559 = vmatprep.subr.mxu0 0.0
    %560 = vmatpush1.msra.mxu0 0.0
    %561 = vmatprep.subr.mxu0 0.0
    %562 = vmatpush1.msra.mxu0 0.0
    %563 = vmatprep.subr.mxu0 0.0
    %564 = vmatpush1.msra.mxu0 0.0
    %565 = vmatprep.subr.mxu0 0.0
    %566 = vmatpush1.msra.mxu0 0.0
    %567 = vmatprep.subr.mxu0 0.0
    %568 = vmatpush1.msra.mxu0 0.0
    %569 = vmatprep.subr.mxu0 0.0
    %570 = vmatpush1.msra.mxu0 %v126
    %571 = vmatprep.subr.mxu0 0.0
    %572 = vmatpush1.msra.mxu0 %v125
    %573 = vmatprep.subr.mxu0 0.0
    %574 = vmatpush1.msra.mxu0 %v124
    %575 = vmatprep.subr.mxu0 0.0
    %576 = vmatpush1.msra.mxu0 %v123
    %577 = vmatprep.subr.mxu0 0.0
    %578 = vmatpush2.msra.mxu0 0.0
    %579 = vmatprep.subr.mxu0 0.0
    %580 = vmatpush2.msra.mxu0 0.0
    %581 = vmatprep.subr.mxu0 0.0
    %582 = vmatpush2.msra.mxu0 0.0
    %583 = vmatprep.subr.mxu0 0.0
    %584 = vmatpush2.msra.mxu0 0.0
    %585 = vmatprep.subr.mxu0 0.0
    %586 = vmatpush2.msra.mxu0 0.0
    %587 = vmatprep.subr.mxu0 0.0
    %588 = vmatpush2.msra.mxu0 0.0
    %589 = vmatprep.subr.mxu0 0.0
    %590 = vmatpush2.msra.mxu0 0.0
    %591 = vmatprep.subr.mxu0 0.0
    %592 = vmatpush2.msra.mxu0 0.0
    %593 = vmatprep.subr.mxu0 0.0
    %594 = vmatpush2.msra.mxu0 0.0
    %595 = vmatprep.subr.mxu0 0.0
    %596 = vmatpush2.msra.mxu0 0.0
    %597 = vmatprep.subr.mxu0 0.0
    %598 = vmatpush2.msra.mxu0 0.0
    %599 = vmatprep.subr.mxu0 0.0
    %600 = vmatpush2.msra.mxu0 0.0
    %601 = vmatprep.subr.mxu0 0.0
    %602 = vmatpush2.msra.mxu0 0.0
    %603 = vmatprep.subr.mxu0 0.0
    %604 = vmatpush2.msra.mxu0 0.0
    %605 = vmatprep.subr.mxu0 0.0
    %606 = vmatpush2.msra.mxu0 0.0
    %607 = vmatprep.subr.mxu0 0.0
    %608 = vmatpush2.msra.mxu0 0.0
    %609 = vmatprep.mubr.f32.mxu0 0.0
    %610 = vmatmul.mubr.f32.gmra.mxu0 %v543
    %v611 = vpop.f32.mrf.mxu0
    %v612 = vadd.f32 0.0, %v611
    %v613 = vpop.f32.mrf.mxu0
    %614 = vdwg.mxu0
    %v615 = vadd.f32 %v542, %v612
    %v616 = vxor.u32 %v615, 2147483648
    %v617 = vmul.f32 %v616, 1.442695
    %v618 = vpow.pop %v617
    %v619 = vadd.f32 %v618, 1.0
    %v620 = vrcp.pop %v619
    %v621 = vmul.f32 1.0, %v620
    %v622 = vtanh.pop %v615
    %v623 = vmul.f32 %v621, %v530
    %625 = vrot.lane.b32.xlu0 %v622, 64
    %v626 = vpop.permute.xlu0 %625
    %v628 = vmul.f32 %v621, %v626
    %630 = vrot.lane.b32.xlu0 %v628, 32
    %v631 = vpop.permute.xlu0 %630
    %v633 = vadd.f32 %v623, %v631
    %v634 = vtanh.pop %v633
    %636 = vrot.lane.b32.xlu0 %v634, 64
    %v637 = vpop.permute.xlu0 %636
    %v639 = vmul.f32 %v621, %v637
    %641 = vrot.lane.b32.xlu0 %v639, 32
    %v642 = vpop.permute.xlu0 %641
    %644 = vst.msk [vmem:[#allocation3 + $0x4] sm:$0x1] %vm231, %v642
    %v645 = vld [vmem:[#allocation2 + $0x5] sm:$0x1]
    %v646 = vsel %vm128, %v642, 0
    %648 = vmatprep.subr.mxu0 0.0
    %649 = vmatpush1.msra.mxu0 0.0
    %650 = vmatprep.subr.mxu0 0.0
    %651 = vmatpush1.msra.mxu0 0.0
    %652 = vmatprep.subr.mxu0 0.0
    %653 = vmatpush1.msra.mxu0 0.0
    %654 = vmatprep.subr.mxu0 0.0
    %655 = vmatpush1.msra.mxu0 0.0
    %656 = vmatprep.subr.mxu0 0.0
    %657 = vmatpush1.msra.mxu0 0.0
    %658 = vmatprep.subr.mxu0 0.0
    %659 = vmatpush1.msra.mxu0 0.0
    %660 = vmatprep.subr.mxu0 0.0
    %661 = vmatpush1.msra.mxu0 0.0
    %662 = vmatprep.subr.mxu0 0.0
    %663 = vmatpush1.msra.mxu0 0.0
    %664 = vmatprep.subr.mxu0 0.0
    %665 = vmatpush1.msra.mxu0 0.0
    %666 = vmatprep.subr.mxu0 0.0
    %667 = vmatpush1.msra.mxu0 0.0
    %668 = vmatprep.subr.mxu0 0.0
    %669 = vmatpush1.msra.mxu0 0.0
    %670 = vmatprep.subr.mxu0 0.0
    %671 = vmatpush1.msra.mxu0 0.0
    %672 = vmatprep.subr.mxu0 0.0
    %673 = vmatpush1.msra.mxu0 %v126
    %674 = vmatprep.subr.mxu0 0.0
    %675 = vmatpush1.msra.mxu0 %v125
    %676 = vmatprep.subr.mxu0 0.0
    %677 = vmatpush1.msra.mxu0 %v124
    %678 = vmatprep.subr.mxu0 0.0
    %679 = vmatpush1.msra.mxu0 %v123
    %680 = vmatprep.subr.mxu0 0.0
    %681 = vmatpush2.msra.mxu0 0.0
    %682 = vmatprep.subr.mxu0 0.0
    %683 = vmatpush2.msra.mxu0 0.0
    %684 = vmatprep.subr.mxu0 0.0
    %685 = vmatpush2.msra.mxu0 0.0
    %686 = vmatprep.subr.mxu0 0.0
    %687 = vmatpush2.msra.mxu0 0.0
    %688 = vmatprep.subr.mxu0 0.0
    %689 = vmatpush2.msra.mxu0 0.0
    %690 = vmatprep.subr.mxu0 0.0
    %691 = vmatpush2.msra.mxu0 0.0
    %692 = vmatprep.subr.mxu0 0.0
    %693 = vmatpush2.msra.mxu0 0.0
    %694 = vmatprep.subr.mxu0 0.0
    %695 = vmatpush2.msra.mxu0 0.0
    %696 = vmatprep.subr.mxu0 0.0
    %697 = vmatpush2.msra.mxu0 0.0
    %698 = vmatprep.subr.mxu0 0.0
    %699 = vmatpush2.msra.mxu0 0.0
    %700 = vmatprep.subr.mxu0 0.0
    %701 = vmatpush2.msra.mxu0 0.0
    %702 = vmatprep.subr.mxu0 0.0
    %703 = vmatpush2.msra.mxu0 0.0
    %704 = vmatprep.subr.mxu0 0.0
    %705 = vmatpush2.msra.mxu0 0.0
    %706 = vmatprep.subr.mxu0 0.0
    %707 = vmatpush2.msra.mxu0 0.0
    %708 = vmatprep.subr.mxu0 0.0
    %709 = vmatpush2.msra.mxu0 0.0
    %710 = vmatprep.subr.mxu0 0.0
    %711 = vmatpush2.msra.mxu0 0.0
    %712 = vmatprep.mubr.f32.mxu0 0.0
    %713 = vmatmul.mubr.f32.gmra.mxu0 %v646
    %v714 = vpop.f32.mrf.mxu0
    %v715 = vadd.f32 0.0, %v714
    %v716 = vpop.f32.mrf.mxu0
    %717 = vdwg.mxu0
    %v718 = vadd.f32 %v645, %v715
    %v719 = vxor.u32 %v718, 2147483648
    %v720 = vmul.f32 %v719, 1.442695
    %v721 = vpow.pop %v720
    %v722 = vadd.f32 %v721, 1.0
    %v723 = vrcp.pop %v722
    %v724 = vmul.f32 1.0, %v723
    %v725 = vtanh.pop %v718
    %v726 = vmul.f32 %v724, %v633
    %728 = vrot.lane.b32.xlu0 %v725, 64
    %v729 = vpop.permute.xlu0 %728
    %v731 = vmul.f32 %v724, %v729
    %733 = vrot.lane.b32.xlu0 %v731, 32
    %v734 = vpop.permute.xlu0 %733
    %v736 = vadd.f32 %v726, %v734
    %v737 = vtanh.pop %v736
    %739 = vrot.lane.b32.xlu0 %v737, 64
    %v740 = vpop.permute.xlu0 %739
    %v742 = vmul.f32 %v724, %v740
    %744 = vrot.lane.b32.xlu0 %v742, 32
    %v745 = vpop.permute.xlu0 %744
    %747 = vst.msk [vmem:[#allocation3 + $0x5] sm:$0x1] %vm231, %v745
    %v748 = vld [vmem:[#allocation2 + $0x6] sm:$0x1]
    %v749 = vsel %vm128, %v745, 0
    %751 = vmatprep.subr.mxu0 0.0
    %752 = vmatpush1.msra.mxu0 0.0
    %753 = vmatprep.subr.mxu0 0.0
    %754 = vmatpush1.msra.mxu0 0.0
    %755 = vmatprep.subr.mxu0 0.0
    %756 = vmatpush1.msra.mxu0 0.0
    %757 = vmatprep.subr.mxu0 0.0
    %758 = vmatpush1.msra.mxu0 0.0
    %759 = vmatprep.subr.mxu0 0.0
    %760 = vmatpush1.msra.mxu0 0.0
    %761 = vmatprep.subr.mxu0 0.0
    %762 = vmatpush1.msra.mxu0 0.0
    %763 = vmatprep.subr.mxu0 0.0
    %764 = vmatpush1.msra.mxu0 0.0
    %765 = vmatprep.subr.mxu0 0.0
    %766 = vmatpush1.msra.mxu0 0.0
    %767 = vmatprep.subr.mxu0 0.0
    %768 = vmatpush1.msra.mxu0 0.0
    %769 = vmatprep.subr.mxu0 0.0
    %770 = vmatpush1.msra.mxu0 0.0
    %771 = vmatprep.subr.mxu0 0.0
    %772 = vmatpush1.msra.mxu0 0.0
    %773 = vmatprep.subr.mxu0 0.0
    %774 = vmatpush1.msra.mxu0 0.0
    %775 = vmatprep.subr.mxu0 0.0
    %776 = vmatpush1.msra.mxu0 %v126
    %777 = vmatprep.subr.mxu0 0.0
    %778 = vmatpush1.msra.mxu0 %v125
    %779 = vmatprep.subr.mxu0 0.0
    %780 = vmatpush1.msra.mxu0 %v124
    %781 = vmatprep.subr.mxu0 0.0
    %782 = vmatpush1.msra.mxu0 %v123
    %783 = vmatprep.subr.mxu0 0.0
    %784 = vmatpush2.msra.mxu0 0.0
    %785 = vmatprep.subr.mxu0 0.0
    %786 = vmatpush2.msra.mxu0 0.0
    %787 = vmatprep.subr.mxu0 0.0
    %788 = vmatpush2.msra.mxu0 0.0
    %789 = vmatprep.subr.mxu0 0.0
    %790 = vmatpush2.msra.mxu0 0.0
    %791 = vmatprep.subr.mxu0 0.0
    %792 = vmatpush2.msra.mxu0 0.0
    %793 = vmatprep.subr.mxu0 0.0
    %794 = vmatpush2.msra.mxu0 0.0
    %795 = vmatprep.subr.mxu0 0.0
    %796 = vmatpush2.msra.mxu0 0.0
    %797 = vmatprep.subr.mxu0 0.0
    %798 = vmatpush2.msra.mxu0 0.0
    %799 = vmatprep.subr.mxu0 0.0
    %800 = vmatpush2.msra.mxu0 0.0
    %801 = vmatprep.subr.mxu0 0.0
    %802 = vmatpush2.msra.mxu0 0.0
    %803 = vmatprep.subr.mxu0 0.0
    %804 = vmatpush2.msra.mxu0 0.0
    %805 = vmatprep.subr.mxu0 0.0
    %806 = vmatpush2.msra.mxu0 0.0
    %807 = vmatprep.subr.mxu0 0.0
    %808 = vmatpush2.msra.mxu0 0.0
    %809 = vmatprep.subr.mxu0 0.0
    %810 = vmatpush2.msra.mxu0 0.0
    %811 = vmatprep.subr.mxu0 0.0
    %812 = vmatpush2.msra.mxu0 0.0
    %813 = vmatprep.subr.mxu0 0.0
    %814 = vmatpush2.msra.mxu0 0.0
    %815 = vmatprep.mubr.f32.mxu0 0.0
    %816 = vmatmul.mubr.f32.gmra.mxu0 %v749
    %v817 = vpop.f32.mrf.mxu0
    %v818 = vadd.f32 0.0, %v817
    %v819 = vpop.f32.mrf.mxu0
    %820 = vdwg.mxu0
    %v821 = vadd.f32 %v748, %v818
    %v822 = vxor.u32 %v821, 2147483648
    %v823 = vmul.f32 %v822, 1.442695
    %v824 = vpow.pop %v823
    %v825 = vadd.f32 %v824, 1.0
    %v826 = vrcp.pop %v825
    %v827 = vmul.f32 1.0, %v826
    %v828 = vtanh.pop %v821
    %v829 = vmul.f32 %v827, %v736
    %831 = vrot.lane.b32.xlu0 %v828, 64
    %v832 = vpop.permute.xlu0 %831
    %v834 = vmul.f32 %v827, %v832
    %836 = vrot.lane.b32.xlu0 %v834, 32
    %v837 = vpop.permute.xlu0 %836
    %v839 = vadd.f32 %v829, %v837
    %v840 = vtanh.pop %v839
    %842 = vrot.lane.b32.xlu0 %v840, 64
    %v843 = vpop.permute.xlu0 %842
    %v845 = vmul.f32 %v827, %v843
    %847 = vrot.lane.b32.xlu0 %v845, 32
    %v848 = vpop.permute.xlu0 %847
    %850 = vst.msk [vmem:[#allocation3 + $0x6] sm:$0x1] %vm231, %v848
    %v851 = vld [vmem:[#allocation2 + $0x7] sm:$0x1]
    %v852 = vsel %vm128, %v848, 0
    %854 = vmatprep.subr.mxu0 0.0
    %855 = vmatpush1.msra.mxu0 0.0
    %856 = vmatprep.subr.mxu0 0.0
    %857 = vmatpush1.msra.mxu0 0.0
    %858 = vmatprep.subr.mxu0 0.0
    %859 = vmatpush1.msra.mxu0 0.0
    %860 = vmatprep.subr.mxu0 0.0
    %861 = vmatpush1.msra.mxu0 0.0
    %862 = vmatprep.subr.mxu0 0.0
    %863 = vmatpush1.msra.mxu0 0.0
    %864 = vmatprep.subr.mxu0 0.0
    %865 = vmatpush1.msra.mxu0 0.0
    %866 = vmatprep.subr.mxu0 0.0
    %867 = vmatpush1.msra.mxu0 0.0
    %868 = vmatprep.subr.mxu0 0.0
    %869 = vmatpush1.msra.mxu0 0.0
    %870 = vmatprep.subr.mxu0 0.0
    %871 = vmatpush1.msra.mxu0 0.0
    %872 = vmatprep.subr.mxu0 0.0
    %873 = vmatpush1.msra.mxu0 0.0
    %874 = vmatprep.subr.mxu0 0.0
    %875 = vmatpush1.msra.mxu0 0.0
    %876 = vmatprep.subr.mxu0 0.0
    %877 = vmatpush1.msra.mxu0 0.0
    %878 = vmatprep.subr.mxu0 0.0
    %879 = vmatpush1.msra.mxu0 %v126
    %880 = vmatprep.subr.mxu0 0.0
    %881 = vmatpush1.msra.mxu0 %v125
    %882 = vmatprep.subr.mxu0 0.0
    %883 = vmatpush1.msra.mxu0 %v124
    %884 = vmatprep.subr.mxu0 0.0
    %885 = vmatpush1.msra.mxu0 %v123
    %886 = vmatprep.subr.mxu0 0.0
    %887 = vmatpush2.msra.mxu0 0.0
    %888 = vmatprep.subr.mxu0 0.0
    %889 = vmatpush2.msra.mxu0 0.0
    %890 = vmatprep.subr.mxu0 0.0
    %891 = vmatpush2.msra.mxu0 0.0
    %892 = vmatprep.subr.mxu0 0.0
    %893 = vmatpush2.msra.mxu0 0.0
    %894 = vmatprep.subr.mxu0 0.0
    %895 = vmatpush2.msra.mxu0 0.0
    %896 = vmatprep.subr.mxu0 0.0
    %897 = vmatpush2.msra.mxu0 0.0
    %898 = vmatprep.subr.mxu0 0.0
    %899 = vmatpush2.msra.mxu0 0.0
    %900 = vmatprep.subr.mxu0 0.0
    %901 = vmatpush2.msra.mxu0 0.0
    %902 = vmatprep.subr.mxu0 0.0
    %903 = vmatpush2.msra.mxu0 0.0
    %904 = vmatprep.subr.mxu0 0.0
    %905 = vmatpush2.msra.mxu0 0.0
    %906 = vmatprep.subr.mxu0 0.0
    %907 = vmatpush2.msra.mxu0 0.0
    %908 = vmatprep.subr.mxu0 0.0
    %909 = vmatpush2.msra.mxu0 0.0
    %910 = vmatprep.subr.mxu0 0.0
    %911 = vmatpush2.msra.mxu0 0.0
    %912 = vmatprep.subr.mxu0 0.0
    %913 = vmatpush2.msra.mxu0 0.0
    %914 = vmatprep.subr.mxu0 0.0
    %915 = vmatpush2.msra.mxu0 0.0
    %916 = vmatprep.subr.mxu0 0.0
    %917 = vmatpush2.msra.mxu0 0.0
    %918 = vmatprep.mubr.f32.mxu0 0.0
    %919 = vmatmul.mubr.f32.gmra.mxu0 %v852
    %v920 = vpop.f32.mrf.mxu0
    %v921 = vadd.f32 0.0, %v920
    %v922 = vpop.f32.mrf.mxu0
    %923 = vdwg.mxu0
    %v924 = vadd.f32 %v851, %v921
    %v925 = vxor.u32 %v924, 2147483648
    %v926 = vmul.f32 %v925, 1.442695
    %v927 = vpow.pop %v926
    %v928 = vadd.f32 %v927, 1.0
    %v929 = vrcp.pop %v928
    %v930 = vmul.f32 1.0, %v929
    %v931 = vtanh.pop %v924
    %v932 = vmul.f32 %v930, %v839
    %934 = vrot.lane.b32.xlu0 %v931, 64
    %v935 = vpop.permute.xlu0 %934
    %v937 = vmul.f32 %v930, %v935
    %939 = vrot.lane.b32.xlu0 %v937, 32
    %v940 = vpop.permute.xlu0 %939
    %v942 = vadd.f32 %v932, %v940
    %v943 = vtanh.pop %v942
    %945 = vrot.lane.b32.xlu0 %v943, 64
    %v946 = vpop.permute.xlu0 %945
    %v948 = vmul.f32 %v930, %v946
    %950 = vrot.lane.b32.xlu0 %v948, 32
    %v951 = vpop.permute.xlu0 %950
    %953 = vst.msk [vmem:[#allocation3 + $0x7] sm:$0x1] %vm231, %v951
    %v954 = vld [vmem:[#allocation3] sm:$0xff]
    %v955 = vld [vmem:[%s4] sm:$0xff]
    %v956 = vld [vmem:[%s4 + $0x8] sm:$0xff]
    %v957 = vld [vmem:[%s4 + $0x10] sm:$0xff]
    %v958 = vld [vmem:[%s4 + $0x18] sm:$0xff]
    %v959 = vld [vmem:[%s5] sm:$0x1]
    %v961 = vlaneseq
    %v962 = vshrl.u32 %v961, 7
    %v963 = vsub.s32 0, %v962
    %v964 = vrot.slane %v959, %v963
    %v967 = vsel %vm128, %v954, 0
    %969 = vmatprep.subr.mxu0 0.0
    %970 = vmatpush1.msra.mxu0 0.0
    %971 = vmatprep.subr.mxu0 0.0
    %972 = vmatpush1.msra.mxu0 0.0
    %973 = vmatprep.subr.mxu0 0.0
    %974 = vmatpush1.msra.mxu0 0.0
    %975 = vmatprep.subr.mxu0 0.0
    %976 = vmatpush1.msra.mxu0 0.0
    %977 = vmatprep.subr.mxu0 0.0
    %978 = vmatpush1.msra.mxu0 0.0
    %979 = vmatprep.subr.mxu0 0.0
    %980 = vmatpush1.msra.mxu0 0.0
    %981 = vmatprep.subr.mxu0 0.0
    %982 = vmatpush1.msra.mxu0 0.0
    %983 = vmatprep.subr.mxu0 0.0
    %984 = vmatpush1.msra.mxu0 0.0
    %985 = vmatprep.subr.mxu0 0.0
    %986 = vmatpush1.msra.mxu0 0.0
    %987 = vmatprep.subr.mxu0 0.0
    %988 = vmatpush1.msra.mxu0 0.0
    %989 = vmatprep.subr.mxu0 0.0
    %990 = vmatpush1.msra.mxu0 0.0
    %991 = vmatprep.subr.mxu0 0.0
    %992 = vmatpush1.msra.mxu0 0.0
    %993 = vmatprep.subr.mxu0 0.0
    %994 = vmatpush1.msra.mxu0 %v958
    %995 = vmatprep.subr.mxu0 0.0
    %996 = vmatpush1.msra.mxu0 %v957
    %997 = vmatprep.subr.mxu0 0.0
    %998 = vmatpush1.msra.mxu0 %v956
    %999 = vmatprep.subr.mxu0 0.0
    %1000 = vmatpush1.msra.mxu0 %v955
    %1001 = vmatprep.subr.mxu0 0.0
    %1002 = vmatpush2.msra.mxu0 0.0
    %1003 = vmatprep.subr.mxu0 0.0
    %1004 = vmatpush2.msra.mxu0 0.0
    %1005 = vmatprep.subr.mxu0 0.0
    %1006 = vmatpush2.msra.mxu0 0.0
    %1007 = vmatprep.subr.mxu0 0.0
    %1008 = vmatpush2.msra.mxu0 0.0
    %1009 = vmatprep.subr.mxu0 0.0
    %1010 = vmatpush2.msra.mxu0 0.0
    %1011 = vmatprep.subr.mxu0 0.0
    %1012 = vmatpush2.msra.mxu0 0.0
    %1013 = vmatprep.subr.mxu0 0.0
    %1014 = vmatpush2.msra.mxu0 0.0
    %1015 = vmatprep.subr.mxu0 0.0
    %1016 = vmatpush2.msra.mxu0 0.0
    %1017 = vmatprep.subr.mxu0 0.0
    %1018 = vmatpush2.msra.mxu0 0.0
    %1019 = vmatprep.subr.mxu0 0.0
    %1020 = vmatpush2.msra.mxu0 0.0
    %1021 = vmatprep.subr.mxu0 0.0
    %1022 = vmatpush2.msra.mxu0 0.0
    %1023 = vmatprep.subr.mxu0 0.0
    %1024 = vmatpush2.msra.mxu0 0.0
    %1025 = vmatprep.subr.mxu0 0.0
    %1026 = vmatpush2.msra.mxu0 0.0
    %1027 = vmatprep.subr.mxu0 0.0
    %1028 = vmatpush2.msra.mxu0 0.0
    %1029 = vmatprep.subr.mxu0 0.0
    %1030 = vmatpush2.msra.mxu0 0.0
    %1031 = vmatprep.subr.mxu0 0.0
    %1032 = vmatpush2.msra.mxu0 0.0
    %1033 = vmatprep.mubr.f32.mxu0 0.0
    %1034 = vmatmul.mubr.f32.gmra.mxu0 %v967
    %v1035 = vpop.f32.mrf.mxu0
    %v1036 = vadd.f32 %v964, %v1035
    %v1037 = vpop.f32.mrf.mxu0
    %1038 = vdwg.mxu0
    %vm1039 = vcmask 64512
    %v1040 = vsel %vm1039, %v1036, -inf
    %1041 = vmax.xlane.f32.xlu0 %v1040
    %v1042 = vpop.xlane.xlu0 %1041
    %v1043 = vsub.f32 %v1036, %v1042
    %v1044 = vmul.f32 %v1043, 1.442695
    %v1045 = vpow.pop %v1044
    %v1046 = vsel %vm1039, %v1045, 0.0
    %1047 = vadd.xlane.f32.xlu0 %v1046
    %v1048 = vpop.xlane.xlu0 %1047
    %v1049 = vrcp.pop %v1048
    %v1050 = vmul.f32 %v1045, %v1049
    %1051 = vst.msk [vmem:[#allocation7] sm:$0xff] %vm1039, %v1050
    // Predicated region
    $region30: #{tpu_custom_call.1} parent=1 // pred_check
      _
    $region31: #{tpu_custom_call.1} parent=1 // pred_check_branch
      %1053 = sbr.rel (0) target = $region33
    $region32: #{tpu_custom_call.1} parent=1 // pred_region
      %s1055 = ssub.s32 128, 128
      %1056 = vsyncadd [#allocation6], %s1055
      %s1058 = sshll.u32 [#allocation7], 4
      %s1059 = int_to_ptr.vmem [resolvable:$true] %s1058
      %1061 = dma.vmem_to_hbm [thread:$0]  %s1059, 128, %s6, [#allocation6]
    $region33: #{tpu_custom_call.1} parent=1 // pred_fallthru
      _
    // Predicated region
    $region34: #{tpu_custom_call.1} parent=1 // pred_check
      _
    $region35: #{tpu_custom_call.1} parent=1 // pred_check_branch
      %1063 = sbr.rel (0) target = $region37
    $region36: #{tpu_custom_call.1} parent=1 // pred_region
      %1064 = dma.done [#allocation6], 128
    $region37: #{tpu_custom_call.1} parent=1 // pred_fallthru
      _
    %1065 = vsyncpa [#allocation5], 1
    %1066 = vsyncpa [#allocation6], 1

</llo_original>
